<compile_context>
chip_gen: v7x
topology: tpu7x:2x2x1
jax: 0.10.0
libtpu: 0.0.40
codegen_flags: <defaults>
</compile_context>

<pallas_src>
import math
import functools

import jax
import jax.numpy as jnp
from jax import lax
from jax.experimental import pallas as pl
from jax.experimental.pallas import tpu as pltpu


def causal_attn_kernel(x_ref, wq_ref, bq_ref, wk_ref, bk_ref, wv_ref, bv_ref,
                       wp_ref, bp_ref, o_ref, acc_ref, *, neg_bias=-1e30):
    h = pl.program_id(1)

    @pl.when(h == 0)
    def _init():
        acc_ref[...] = jnp.zeros_like(acc_ref)

    x = x_ref[0].astype(jnp.bfloat16)                 # (T, C) bf16 MXU operand
    T = x.shape[0]
    hd = wq_ref.shape[2]
    scale = 1.0 / math.sqrt(hd)

    wq = wq_ref[0].astype(jnp.bfloat16)               # (C, hd), pre-transposed
    wk = wk_ref[0].astype(jnp.bfloat16)
    wv = wv_ref[0].astype(jnp.bfloat16)
    wp = wp_ref[0].astype(jnp.bfloat16)               # (hd, C), pre-transposed

    # Per-head projections: y = x @ W (no in-kernel transpose), f32 accumulate.
    q = jnp.dot(x, wq, preferred_element_type=jnp.float32) + bq_ref[0]   # (T, hd)
    k = jnp.dot(x, wk, preferred_element_type=jnp.float32) + bk_ref[0]
    v = jnp.dot(x, wv, preferred_element_type=jnp.float32) + bv_ref[0]

    # Fold 1/sqrt(hd) into q (T*hd elements instead of T*T scores).
    q = (q * scale).astype(jnp.bfloat16)
    k = k.astype(jnp.bfloat16)
    v = v.astype(jnp.bfloat16)

    # Scores (T, T), f32 accumulation on the MXU.
    s = jnp.einsum('td,sd->ts', q, k, preferred_element_type=jnp.float32)

    # Additive causal mask (0 / -1e30): one VPU add instead of cmp+select on -inf.
    row = lax.broadcasted_iota(jnp.int32, (T, T), 0)
    col = lax.broadcasted_iota(jnp.int32, (T, T), 1)
    s = s + jnp.where(col <= row, 0.0, neg_bias).astype(jnp.float32)

    # Softmax in f32; divide via approx reciprocal on the EUP slot.
    s = s - jnp.max(s, axis=-1, keepdims=True)
    p = jnp.exp(s)
    p = p * pl.reciprocal(jnp.sum(p, axis=-1, keepdims=True), approx=True)

    # Per-head attention output and its output-projection contribution.
    y = jnp.dot(p.astype(jnp.bfloat16), v, preferred_element_type=jnp.float32)  # (T, hd)
    acc_ref[...] += jnp.dot(y.astype(jnp.bfloat16), wp,
                            preferred_element_type=jnp.float32)                 # (T, C)

    @pl.when(h == pl.num_programs(1) - 1)
    def _finalize():
        o_ref[0] = (acc_ref[...] + bp_ref[...].astype(jnp.float32)).astype(o_ref.dtype)


def causal_self_attention(x, params, n_head):
    B, T, C = x.shape
    wq, bq, wk, bk, wv, bv, wp, bp = params
    hd = C // n_head

    # One-time parameter re-layout in XLA (outside the kernel):
    #   nn.Linear weight W is (out, in); we want x @ W.T, split per head.
    def split_qkv(w, b):
        w3 = jnp.transpose(w.T.reshape(C, n_head, hd), (1, 0, 2))  # (n_head, C, hd)
        b3 = b.reshape(n_head, 1, hd)                              # (n_head, 1, hd)
        return w3, b3

    wq3, bq3 = split_qkv(wq, bq)
    wk3, bk3 = split_qkv(wk, bk)
    wv3, bv3 = split_qkv(wv, bv)
    wp3 = wp.T.reshape(n_head, hd, C)                              # (n_head, hd, C)

    head_spec_w = pl.BlockSpec((1, C, hd), lambda b, h: (h, 0, 0))
    head_spec_b = pl.BlockSpec((1, 1, hd), lambda b, h: (h, 0, 0))

    flops = B * (8 * T * C * C + 4 * n_head * T * T * hd)
    bytes_accessed = 4 * (2 * B * T * C + 4 * C * C + 4 * C)
    transcendentals = B * n_head * T * T

    return pl.pallas_call(
        functools.partial(causal_attn_kernel),
        out_shape=jax.ShapeDtypeStruct((B, T, C), x.dtype),
        grid_spec=pltpu.PrefetchScalarGridSpec(
            num_scalar_prefetch=0,
            grid=(B, n_head),
            in_specs=[
                pl.BlockSpec((1, T, C), lambda b, h: (b, 0, 0)),   # x (same block across h)
                head_spec_w, head_spec_b,                          # query
                head_spec_w, head_spec_b,                          # key
                head_spec_w, head_spec_b,                          # value
                pl.BlockSpec((1, hd, C), lambda b, h: (h, 0, 0)),  # proj weight slice
                pl.BlockSpec((1, C), lambda b, h: (0, 0)),         # proj bias
            ],
            out_specs=pl.BlockSpec((1, T, C), lambda b, h: (b, 0, 0)),
            scratch_shapes=[pltpu.VMEM((T, C), jnp.float32)],      # per-batch accumulator
        ),
        compiler_params=pltpu.CompilerParams(
            dimension_semantics=("parallel", "arbitrary")),
        cost_estimate=pl.CostEstimate(flops=flops,
                                      transcendentals=transcendentals,
                                      bytes_accessed=bytes_accessed),
    )(x, wq3, bq3, wk3, bk3, wv3, bv3, wp3, bp)


def reference_attention(x, params, n_head):
    """Pure-JAX f32 reference implementing the PyTorch forward exactly (eval mode)."""
    wq, bq, wk, bk, wv, bv, wp, bp = params
    B, T, C = x.shape
    hd = C // n_head

    def lin(w, b):
        return x @ w.T + b[0]

    def heads(z):
        return jnp.transpose(z.reshape(B, T, n_head, hd), (0, 2, 1, 3))

    q, k, v = heads(lin(wq, bq)), heads(lin(wk, bk)), heads(lin(wv, bv))
    att = (q @ jnp.swapaxes(k, -2, -1)) * (1.0 / math.sqrt(hd))
    mask = jnp.tril(jnp.ones((T, T), dtype=bool))[None, None]
    att = jnp.where(mask, att, -jnp.inf)
    att = jax.nn.softmax(att, axis=-1)
    y = att @ v
    y = jnp.transpose(y, (0, 2, 1, 3)).reshape(B, T, C)
    return y @ wp.T + bp[0]


if __name__ == "__main__":
    # Config: n_embd=32, n_head=4, block_size=8  (head_dim=8)
    B, T, C, n_head = 2, 8, 32, 4

    key = jax.random.PRNGKey(0)
    kx, kq, kk, kv, kp = jax.random.split(key, 5)

    x = jax.random.normal(kx, (B, T, C), dtype=jnp.float32)

    def make_linear(k):
        kw, kb = jax.random.split(k)
        w = 0.02 * jax.random.normal(kw, (C, C), dtype=jnp.float32)
        b = 0.02 * jax.random.normal(kb, (1, C), dtype=jnp.float32)
        return w, b

    wq, bq = make_linear(kq)
    wk, bk = make_linear(kk)
    wv, bv = make_linear(kv)
    wp, bp = make_linear(kp)
    params = (wq, bq, wk, bk, wv, bv, wp, bp)

    out = causal_self_attention(x, params, n_head)
    out = jax.block_until_ready(out)

    ref = reference_attention(x, params, n_head)
    assert out.shape == (B, T, C)
    # Tolerance relaxed vs f32 reference: kernel uses bf16 MXU operands with
    # f32 accumulation and an approx reciprocal in the softmax.
    assert jnp.allclose(out, ref, atol=1e-2, rtol=1e-2), "mismatch vs reference"

    print("KERNEL_OK")
</pallas_src>

<mosaic_0001>
module attributes {stable_mosaic.version = 11 : i64} {
  func.func @causal_attn_kernel(%arg0: i32, %arg1: i32, %arg2: memref<1x8x32xf32, #tpu.memory_space<vmem>>, %arg3: memref<1x32x8xf32, #tpu.memory_space<vmem>>, %arg4: memref<1x1x8xf32, #tpu.memory_space<vmem>>, %arg5: memref<1x32x8xf32, #tpu.memory_space<vmem>>, %arg6: memref<1x1x8xf32, #tpu.memory_space<vmem>>, %arg7: memref<1x32x8xf32, #tpu.memory_space<vmem>>, %arg8: memref<1x1x8xf32, #tpu.memory_space<vmem>>, %arg9: memref<1x8x32xf32, #tpu.memory_space<vmem>>, %arg10: memref<1x32xf32, #tpu.memory_space<vmem>>, %arg11: memref<1x8x32xf32, #tpu.memory_space<vmem>>, %arg12: memref<8x32xf32, #tpu.memory_space<vmem>>) attributes {dimension_semantics = [#tpu.dimension_semantics<parallel>, #tpu.dimension_semantics<arbitrary>], iteration_bounds = array<i64: 2, 4>, scalar_prefetch = 0 : i64, scratch_operands = 1 : i64, tpu.core_type = #tpu.core_type<tc>, window_params = [{transform_indices = @transform_0, window_bounds = array<i64: 1, 8, 32>}, {transform_indices = @transform_1, window_bounds = array<i64: 1, 32, 8>}, {transform_indices = @transform_2, window_bounds = array<i64: 1, 1, 8>}, {transform_indices = @transform_3, window_bounds = array<i64: 1, 32, 8>}, {transform_indices = @transform_4, window_bounds = array<i64: 1, 1, 8>}, {transform_indices = @transform_5, window_bounds = array<i64: 1, 32, 8>}, {transform_indices = @transform_6, window_bounds = array<i64: 1, 1, 8>}, {transform_indices = @transform_7, window_bounds = array<i64: 1, 8, 32>}, {pipeline_mode = #tpu.pipeline_mode<synchronous>, transform_indices = @transform_8, window_bounds = array<i64: 1, 32>}, {transform_indices = @transform_9, window_bounds = array<i64: 1, 8, 32>}]} {
    %c0_i32 = arith.constant 0 : i32
    %0 = arith.cmpi eq, %arg1, %c0_i32 : i32
    %1 = arith.extui %0 : i1 to i32
    %c0_i32_0 = arith.constant 0 : i32
    %2 = arith.cmpi ne, %1, %c0_i32_0 : i32
    scf.if %2 {
      %cst_39 = arith.constant 0.000000e+00 : f32
      %66 = vector.broadcast %cst_39 : f32 to vector<8x32xf32>
      %c0_40 = arith.constant 0 : index
      %c0_41 = arith.constant 0 : index
      %67 = vector.load %arg12[%c0_40, %c0_41] : memref<8x32xf32, #tpu.memory_space<vmem>>, vector<8x32xf32>
      tpu.vector_store %arg12[%c0_40, %c0_41], %66 {strides = array<i32>} : memref<8x32xf32, #tpu.memory_space<vmem>>, vector<8x32xf32>,
    } else {
    }
    %c0 = arith.constant 0 : index
    %c0_1 = arith.constant 0 : index
    %c0_2 = arith.constant 0 : index
    %3 = vector.load %arg2[%c0, %c0_1, %c0_2] : memref<1x8x32xf32, #tpu.memory_space<vmem>>, vector<1x8x32xf32>
    %4 = vector.shape_cast %3 : vector<1x8x32xf32> to vector<8x32xf32>
    %5 = arith.truncf %4 : vector<8x32xf32> to vector<8x32xbf16>
    %c0_3 = arith.constant 0 : index
    %c0_4 = arith.constant 0 : index
    %c0_5 = arith.constant 0 : index
    %6 = vector.load %arg3[%c0_3, %c0_4, %c0_5] : memref<1x32x8xf32, #tpu.memory_space<vmem>>, vector<1x32x8xf32>
    %7 = vector.shape_cast %6 : vector<1x32x8xf32> to vector<32x8xf32>
    %8 = arith.truncf %7 : vector<32x8xf32> to vector<32x8xbf16>
    %c0_6 = arith.constant 0 : index
    %c0_7 = arith.constant 0 : index
    %c0_8 = arith.constant 0 : index
    %9 = vector.load %arg5[%c0_6, %c0_7, %c0_8] : memref<1x32x8xf32, #tpu.memory_space<vmem>>, vector<1x32x8xf32>
    %10 = vector.shape_cast %9 : vector<1x32x8xf32> to vector<32x8xf32>
    %11 = arith.truncf %10 : vector<32x8xf32> to vector<32x8xbf16>
    %c0_9 = arith.constant 0 : index
    %c0_10 = arith.constant 0 : index
    %c0_11 = arith.constant 0 : index
    %12 = vector.load %arg7[%c0_9, %c0_10, %c0_11] : memref<1x32x8xf32, #tpu.memory_space<vmem>>, vector<1x32x8xf32>
    %13 = vector.shape_cast %12 : vector<1x32x8xf32> to vector<32x8xf32>
    %14 = arith.truncf %13 : vector<32x8xf32> to vector<32x8xbf16>
    %c0_12 = arith.constant 0 : index
    %c0_13 = arith.constant 0 : index
    %c0_14 = arith.constant 0 : index
    %15 = vector.load %arg9[%c0_12, %c0_13, %c0_14] : memref<1x8x32xf32, #tpu.memory_space<vmem>>, vector<1x8x32xf32>
    %16 = vector.shape_cast %15 : vector<1x8x32xf32> to vector<8x32xf32>
    %17 = arith.truncf %16 : vector<8x32xf32> to vector<8x32xbf16>
    %cst = arith.constant dense<0.000000e+00> : vector<8x8xf32>
    %18 = tpu.matmul %5, %8, %cst {dimension_numbers = #tpu.dot_dimension_numbers<[1], [0], [0], [1], [0, 0, 1, 1], [], []>} : vector<8x32xbf16>, vector<32x8xbf16>, vector<8x8xf32> -> vector<8x8xf32>
    %c0_15 = arith.constant 0 : index
    %c0_16 = arith.constant 0 : index
    %c0_17 = arith.constant 0 : index
    %19 = vector.load %arg4[%c0_15, %c0_16, %c0_17] : memref<1x1x8xf32, #tpu.memory_space<vmem>>, vector<1x1x8xf32>
    %20 = vector.shape_cast %19 : vector<1x1x8xf32> to vector<1x8xf32>
    %21 = vector.broadcast %20 : vector<1x8xf32> to vector<8x8xf32>
    %22 = arith.addf %18, %21 : vector<8x8xf32>
    %cst_18 = arith.constant dense<0.000000e+00> : vector<8x8xf32>
    %23 = tpu.matmul %5, %11, %cst_18 {dimension_numbers = #tpu.dot_dimension_numbers<[1], [0], [0], [1], [0, 0, 1, 1], [], []>} : vector<8x32xbf16>, vector<32x8xbf16>, vector<8x8xf32> -> vector<8x8xf32>
    %c0_19 = arith.constant 0 : index
    %c0_20 = arith.constant 0 : index
    %c0_21 = arith.constant 0 : index
    %24 = vector.load %arg6[%c0_19, %c0_20, %c0_21] : memref<1x1x8xf32, #tpu.memory_space<vmem>>, vector<1x1x8xf32>
    %25 = vector.shape_cast %24 : vector<1x1x8xf32> to vector<1x8xf32>
    %26 = vector.broadcast %25 : vector<1x8xf32> to vector<8x8xf32>
    %27 = arith.addf %23, %26 : vector<8x8xf32>
    %cst_22 = arith.constant dense<0.000000e+00> : vector<8x8xf32>
    %28 = tpu.matmul %5, %14, %cst_22 {dimension_numbers = #tpu.dot_dimension_numbers<[1], [0], [0], [1], [0, 0, 1, 1], [], []>} : vector<8x32xbf16>, vector<32x8xbf16>, vector<8x8xf32> -> vector<8x8xf32>
    %c0_23 = arith.constant 0 : index
    %c0_24 = arith.constant 0 : index
    %c0_25 = arith.constant 0 : index
    %29 = vector.load %arg8[%c0_23, %c0_24, %c0_25] : memref<1x1x8xf32, #tpu.memory_space<vmem>>, vector<1x1x8xf32>
    %30 = vector.shape_cast %29 : vector<1x1x8xf32> to vector<1x8xf32>
    %31 = vector.broadcast %30 : vector<1x8xf32> to vector<8x8xf32>
    %32 = arith.addf %28, %31 : vector<8x8xf32>
    %cst_26 = arith.constant 0.353553385 : f32
    %33 = vector.broadcast %cst_26 : f32 to vector<8x8xf32>
    %34 = arith.mulf %22, %33 : vector<8x8xf32>
    %35 = arith.truncf %34 : vector<8x8xf32> to vector<8x8xbf16>
    %36 = arith.truncf %27 : vector<8x8xf32> to vector<8x8xbf16>
    %37 = arith.truncf %32 : vector<8x8xf32> to vector<8x8xbf16>
    "tpu.trace_start"() <{level = 10 : i32, message = "td,sd->ts"}> : () -> ()
    %cst_27 = arith.constant dense<0.000000e+00> : vector<8x8xf32>
    %38 = tpu.matmul %35, %36, %cst_27 {dimension_numbers = #tpu.dot_dimension_numbers<[1], [1], [0], [0], [0, 0, 1, 0], [], []>} : vector<8x8xbf16>, vector<8x8xbf16>, vector<8x8xf32> -> vector<8x8xf32>
    "tpu.trace_stop"() : () -> ()
    %39 = tpu.iota {dimensions = array<i32: 0>} : vector<8x8xi32>
    %40 = tpu.iota {dimensions = array<i32: 1>} : vector<8x8xi32>
    %41 = arith.cmpi sle, %40, %39 : vector<8x8xi32>
    %cst_28 = arith.constant 0.000000e+00 : f32
    %cst_29 = arith.constant -1.000000e+30 : f32
    %42 = vector.broadcast %cst_28 : f32 to vector<8x8xf32>
    %43 = vector.broadcast %cst_29 : f32 to vector<8x8xf32>
    %44 = arith.select %41, %42, %43 : vector<8x8xi1>, vector<8x8xf32>
    %45 = arith.addf %38, %44 : vector<8x8xf32>
    %cst_30 = arith.constant dense<0xFF800000> : vector<8xf32>
    %46 = vector.multi_reduction <maximumf>, %45, %cst_30 [1] : vector<8x8xf32> to vector<8xf32>
    %47 = vector.shape_cast %46 : vector<8xf32> to vector<8x1xf32>
    %48 = vector.broadcast %47 : vector<8x1xf32> to vector<8x8xf32>
    %49 = arith.subf %45, %48 : vector<8x8xf32>
    %50 = math.exp %49 : vector<8x8xf32>
    %cst_31 = arith.constant dense<0.000000e+00> : vector<8xf32>
    %51 = vector.multi_reduction <add>, %50, %cst_31 [1] : vector<8x8xf32> to vector<8xf32>
    %52 = vector.shape_cast %51 : vector<8xf32> to vector<8x1xf32>
    %53 = tpu.reciprocal %52 {approx = true} : vector<8x1xf32> -> vector<8x1xf32>
    %54 = vector.broadcast %53 : vector<8x1xf32> to vector<8x8xf32>
    %55 = arith.mulf %50, %54 : vector<8x8xf32>
    %56 = arith.truncf %55 : vector<8x8xf32> to vector<8x8xbf16>
    %cst_32 = arith.constant dense<0.000000e+00> : vector<8x8xf32>
    %57 = tpu.matmul %56, %37, %cst_32 {dimension_numbers = #tpu.dot_dimension_numbers<[1], [0], [0], [1], [0, 0, 1, 1], [], []>} : vector<8x8xbf16>, vector<8x8xbf16>, vector<8x8xf32> -> vector<8x8xf32>
    %c0_33 = arith.constant 0 : index
    %c0_34 = arith.constant 0 : index
    %58 = vector.load %arg12[%c0_33, %c0_34] : memref<8x32xf32, #tpu.memory_space<vmem>>, vector<8x32xf32>
    %59 = arith.truncf %57 : vector<8x8xf32> to vector<8x8xbf16>
    %cst_35 = arith.constant dense<0.000000e+00> : vector<8x32xf32>
    %60 = tpu.matmul %59, %17, %cst_35 {dimension_numbers = #tpu.dot_dimension_numbers<[1], [0], [0], [1], [0, 0, 1, 1], [], []>} : vector<8x8xbf16>, vector<8x32xbf16>, vector<8x32xf32> -> vector<8x32xf32>
    %61 = arith.addf %58, %60 : vector<8x32xf32>
    %c0_36 = arith.constant 0 : index
    %c0_37 = arith.constant 0 : index
    %62 = vector.load %arg12[%c0_36, %c0_37] : memref<8x32xf32, #tpu.memory_space<vmem>>, vector<8x32xf32>
    tpu.vector_store %arg12[%c0_36, %c0_37], %61 {strides = array<i32>} : memref<8x32xf32, #tpu.memory_space<vmem>>, vector<8x32xf32>,
    %c3_i32 = arith.constant 3 : i32
    %63 = arith.cmpi eq, %arg1, %c3_i32 : i32
    %64 = arith.extui %63 : i1 to i32
    %c0_i32_38 = arith.constant 0 : i32
    %65 = arith.cmpi ne, %64, %c0_i32_38 : i32
    scf.if %65 {
      %c0_39 = arith.constant 0 : index
      %c0_40 = arith.constant 0 : index
      %66 = vector.load %arg12[%c0_39, %c0_40] : memref<8x32xf32, #tpu.memory_space<vmem>>, vector<8x32xf32>
      %c0_41 = arith.constant 0 : index
      %c0_42 = arith.constant 0 : index
      %67 = vector.load %arg10[%c0_41, %c0_42] : memref<1x32xf32, #tpu.memory_space<vmem>>, vector<1x32xf32>
      %68 = vector.broadcast %67 : vector<1x32xf32> to vector<8x32xf32>
      %69 = arith.addf %66, %68 : vector<8x32xf32>
      %c0_43 = arith.constant 0 : index
      %c0_44 = arith.constant 0 : index
      %c0_45 = arith.constant 0 : index
      %70 = vector.load %arg11[%c0_43, %c0_44, %c0_45] : memref<1x8x32xf32, #tpu.memory_space<vmem>>, vector<1x8x32xf32>
      %71 = vector.shape_cast %70 : vector<1x8x32xf32> to vector<8x32xf32>
      %72 = vector.shape_cast %69 : vector<8x32xf32> to vector<1x8x32xf32>
      tpu.vector_store %arg11[%c0_43, %c0_44, %c0_45], %72 {strides = array<i32>} : memref<1x8x32xf32, #tpu.memory_space<vmem>>, vector<1x8x32xf32>,
    } else {
    }
    return
  }
  func.func @transform_0(%arg0: i32, %arg1: i32) -> (i32, i32, i32) {
    %c0_i32 = arith.constant 0 : i32
    %c0_i32_0 = arith.constant 0 : i32
    %c0_i32_1 = arith.constant 0 : i32
    return %arg0, %c0_i32, %c0_i32_0 : i32, i32, i32
  }
  func.func @transform_1(%arg0: i32, %arg1: i32) -> (i32, i32, i32) {
    %c0_i32 = arith.constant 0 : i32
    %c0_i32_0 = arith.constant 0 : i32
    %c0_i32_1 = arith.constant 0 : i32
    return %arg1, %c0_i32, %c0_i32_0 : i32, i32, i32
  }
  func.func @transform_2(%arg0: i32, %arg1: i32) -> (i32, i32, i32) {
    %c0_i32 = arith.constant 0 : i32
    %c0_i32_0 = arith.constant 0 : i32
    %c0_i32_1 = arith.constant 0 : i32
    return %arg1, %c0_i32, %c0_i32_0 : i32, i32, i32
  }
  func.func @transform_3(%arg0: i32, %arg1: i32) -> (i32, i32, i32) {
    %c0_i32 = arith.constant 0 : i32
    %c0_i32_0 = arith.constant 0 : i32
    %c0_i32_1 = arith.constant 0 : i32
    return %arg1, %c0_i32, %c0_i32_0 : i32, i32, i32
  }
  func.func @transform_4(%arg0: i32, %arg1: i32) -> (i32, i32, i32) {
    %c0_i32 = arith.constant 0 : i32
    %c0_i32_0 = arith.constant 0 : i32
    %c0_i32_1 = arith.constant 0 : i32
    return %arg1, %c0_i32, %c0_i32_0 : i32, i32, i32
  }
  func.func @transform_5(%arg0: i32, %arg1: i32) -> (i32, i32, i32) {
    %c0_i32 = arith.constant 0 : i32
    %c0_i32_0 = arith.constant 0 : i32
    %c0_i32_1 = arith.constant 0 : i32
    return %arg1, %c0_i32, %c0_i32_0 : i32, i32, i32
  }
  func.func @transform_6(%arg0: i32, %arg1: i32) -> (i32, i32, i32) {
    %c0_i32 = arith.constant 0 : i32
    %c0_i32_0 = arith.constant 0 : i32
    %c0_i32_1 = arith.constant 0 : i32
    return %arg1, %c0_i32, %c0_i32_0 : i32, i32, i32
  }
  func.func @transform_7(%arg0: i32, %arg1: i32) -> (i32, i32, i32) {
    %c0_i32 = arith.constant 0 : i32
    %c0_i32_0 = arith.constant 0 : i32
    %c0_i32_1 = arith.constant 0 : i32
    return %arg1, %c0_i32, %c0_i32_0 : i32, i32, i32
  }
  func.func @transform_8(%arg0: i32, %arg1: i32) -> (i32, i32) {
    %c0_i32 = arith.constant 0 : i32
    %c0_i32_0 = arith.constant 0 : i32
    %c0_i32_1 = arith.constant 0 : i32
    return %c0_i32, %c0_i32_0 : i32, i32
  }
  func.func @transform_9(%arg0: i32, %arg1: i32) -> (i32, i32, i32) {
    %c0_i32 = arith.constant 0 : i32
    %c0_i32_0 = arith.constant 0 : i32
    %c0_i32_1 = arith.constant 0 : i32
    return %arg0, %c0_i32, %c0_i32_0 : i32, i32, i32
  }
}

</mosaic_0001>

<llo_original>
// kernel: tpu_custom_call.1
$region0: #{tpu_custom_call.1}
  #allocation0 [shape = 'u32[]', space=smem, size = 0x4, offset = 0x4, fixed_abs, tag = 'smem constant byte address 0x4 - core index']
  #allocation1 [shape = 'u32[144,128]{1,0:T(1,128)}', space=vmem, size = 0x12000, scoped, tag = 'internal scratch']
  #allocation2 [shape = 'f32[8,32]{1,0:T(8,128)}', space=vmem, size = 0x1000, scoped, tag = 'scratch operand']
  %s0 = inlined_call_operand.vmem [shape: f32[2,8,32], index: 0, kind: input, shape index: {}]
  %s1 = inlined_call_operand.vmem [shape: f32[4,32,8], index: 1, kind: input, shape index: {}]
  %s2 = inlined_call_operand.vmem [shape: f32[4,1,8], index: 2, kind: input, shape index: {}]
  %s3 = inlined_call_operand.vmem [shape: f32[4,32,8], index: 3, kind: input, shape index: {}]
  %s4 = inlined_call_operand.vmem [shape: f32[4,1,8], index: 4, kind: input, shape index: {}]
  %s5 = inlined_call_operand.vmem [shape: f32[4,32,8], index: 5, kind: input, shape index: {}]
  %s6 = inlined_call_operand.vmem [shape: f32[4,1,8], index: 6, kind: input, shape index: {}]
  %s7 = inlined_call_operand.vmem [shape: f32[4,8,32], index: 7, kind: input, shape index: {}]
  %s8 = inlined_call_operand.vmem [shape: f32[1,32], index: 8, kind: input, shape index: {}]
  %s9 = inlined_call_operand.hbm [shape: f32[2,8,32], index: 9, kind: output, shape index: {}]
  %s10 = sld [smem:[#allocation0]]
  $region77: #{tpu_custom_call.1} parent=0
    _
  %s12 = ssub.s32 1, %s10
  %s13 = scalar_select 0, %s12, %s10
  $region1: #{tpu_custom_call.1} parent=0
    #allocation3 [shape = 'u8[8192]{0}', space=vmem, size = 0x2000, scoped, tag = 'output window, operand 0']
    #allocation4 [shape = 's32[2]{0}', space=sflag, size = 0x8, scoped, tag = 'scoped memory for tpu_custom_call.1']
    %14 = vsyncpa [#allocation4], 0
    %s15 = scalar_lea.sflag [#allocation4], 1
    %16 = vsyncpa %s15, 0
    loop: start=0, step=1, limit=10
    $region2: #{tpu_custom_call.1} parent=1 // loop_pre_header
      _
    $region3: #{tpu_custom_call.1} parent=1 // loop_header
      %s18 = sphi 0, %s22
      %p19 = scmp.ge.s32.totalorder %s18, 10
      %s25 = sphi 0, %s37
      %s26 = sphi 0, %s33
      %s27 = sphi 0, %s25
      %s28 = sphi 0, %s26
      %s29 = sphi 0, %s27
      %s30 = sphi 0, %s28
      %s40 = sphi 0, %s42
      %s43 = sphi 0, %s40
      %s44 = sphi 0, %s43
      %s60 = sphi 0, %s44
      %s66 = sphi 0, %s68
      %s69 = sphi 0, %s66
      %s70 = sphi 0, %s69
      %s86 = sphi 0, %s70
      %s92 = sphi 0, %s94
      %s95 = sphi 0, %s92
      %s96 = sphi 0, %s95
      %s112 = sphi 0, %s96
      %s118 = sphi 0, %s120
      %s121 = sphi 0, %s118
      %s122 = sphi 0, %s121
      %s138 = sphi 0, %s122
      %s144 = sphi 0, %s146
      %s147 = sphi 0, %s144
      %s148 = sphi 0, %s147
      %s164 = sphi 0, %s148
      %s170 = sphi 0, %s172
      %s173 = sphi 0, %s170
      %s174 = sphi 0, %s173
      %s190 = sphi 0, %s174
      %s196 = sphi 0, %s198
      %s199 = sphi 0, %s196
      %s200 = sphi 0, %s199
      %s216 = sphi 0, %s200
      %s222 = sphi 0, %s224
      %s225 = sphi 0, %s222
      %s226 = sphi 0, %s225
      %s242 = sphi 0, %s226
      %s246 = sphi 0, %s246
      %s248 = sphi 0, %s246
      %s249 = sphi 0, %s248
      %s263 = sphi 0, %s249
      %s269 = sphi 0, %s271
      %s272 = sphi 0, %s269
      %s273 = sphi 0, %s272
      %s289 = sphi 0, %s273
    $region4: #{tpu_custom_call.1} parent=1 // loop_header_branch
      %21 = sbr.rel (%p19) target = $region8
    $region5: #{tpu_custom_call.1} parent=1 // loop_body
      %s23 = ssub.s32 %s18, 1
      %s24 = ssub.s32 %s18, 2
      %s31 = sadd.s32 1, %s26
      %p32 = scmp.ge.s32.totalorder %s31, 4
      %s33 = scalar_select %p32, 0, %s31
      %s34 = sadd.s32 1, %s25
      %s35 = scalar_select %p32, %s34, %s25
      %p36 = scmp.ge.s32.totalorder %s35, 2
      %s37 = scalar_select %p36, 0, %s35
      %s38 = ssub.s32 %s25, %s37
      %p39 = scmp.eq.s32.totalorder %s38, 0
      %s41 = sadd.s32 %s40, 1
      %s42 = scalar_select %p39, %s40, %s41
      %p45 = pneg %p39
      %p46 = scmp.eq.s32.totalorder %s18, 7
      %p47 = por %p45, %p46
      %p48 = scmp.ne.s32.totalorder %s40, %s43
      %p49 = scmp.eq.s32.totalorder %s18, 0
      %p50 = por %p48, %p49
      %p51 = scmp.ne.s32.totalorder %s40, %s43
      %p52 = scmp.eq.s32.totalorder %s23, 7
      %p53 = por %p51, %p52
      %p54 = scmp.ne.s32.totalorder %s43, %s44
      %p55 = scmp.eq.s32.totalorder %s23, 0
      %p56 = por %p54, %p55
      %p57 = scmp.ne.s32.totalorder %s43, %s44
      %p58 = scmp.eq.s32.totalorder %s24, 7
      %p59 = por %p57, %p58
      %p61 = scmp.ne.s32.totalorder %s44, %s60
      %p62 = scmp.eq.s32.totalorder %s24, 0
      %p63 = por %p61, %p62
      %s64 = ssub.s32 %s26, %s33
      %p65 = scmp.eq.s32.totalorder %s64, 0
      %s67 = sadd.s32 %s66, 1
      %s68 = scalar_select %p65, %s66, %s67
      %p71 = pneg %p65
      %p72 = scmp.eq.s32.totalorder %s18, 7
      %p73 = por %p71, %p72
      %p74 = scmp.ne.s32.totalorder %s66, %s69
      %p75 = scmp.eq.s32.totalorder %s18, 0
      %p76 = por %p74, %p75
      %p77 = scmp.ne.s32.totalorder %s66, %s69
      %p78 = scmp.eq.s32.totalorder %s23, 7
      %p79 = por %p77, %p78
      %p80 = scmp.ne.s32.totalorder %s69, %s70
      %p81 = scmp.eq.s32.totalorder %s23, 0
      %p82 = por %p80, %p81
      %p83 = scmp.ne.s32.totalorder %s69, %s70
      %p84 = scmp.eq.s32.totalorder %s24, 7
      %p85 = por %p83, %p84
      %p87 = scmp.ne.s32.totalorder %s70, %s86
      %p88 = scmp.eq.s32.totalorder %s24, 0
      %p89 = por %p87, %p88
      %s90 = ssub.s32 %s26, %s33
      %p91 = scmp.eq.s32.totalorder %s90, 0
      %s93 = sadd.s32 %s92, 1
      %s94 = scalar_select %p91, %s92, %s93
      %p97 = pneg %p91
      %p98 = scmp.eq.s32.totalorder %s18, 7
      %p99 = por %p97, %p98
      %p100 = scmp.ne.s32.totalorder %s92, %s95
      %p101 = scmp.eq.s32.totalorder %s18, 0
      %p102 = por %p100, %p101
      %p103 = scmp.ne.s32.totalorder %s92, %s95
      %p104 = scmp.eq.s32.totalorder %s23, 7
      %p105 = por %p103, %p104
      %p106 = scmp.ne.s32.totalorder %s95, %s96
      %p107 = scmp.eq.s32.totalorder %s23, 0
      %p108 = por %p106, %p107
      %p109 = scmp.ne.s32.totalorder %s95, %s96
      %p110 = scmp.eq.s32.totalorder %s24, 7
      %p111 = por %p109, %p110
      %p113 = scmp.ne.s32.totalorder %s96, %s112
      %p114 = scmp.eq.s32.totalorder %s24, 0
      %p115 = por %p113, %p114
      %s116 = ssub.s32 %s26, %s33
      %p117 = scmp.eq.s32.totalorder %s116, 0
      %s119 = sadd.s32 %s118, 1
      %s120 = scalar_select %p117, %s118, %s119
      %p123 = pneg %p117
      %p124 = scmp.eq.s32.totalorder %s18, 7
      %p125 = por %p123, %p124
      %p126 = scmp.ne.s32.totalorder %s118, %s121
      %p127 = scmp.eq.s32.totalorder %s18, 0
      %p128 = por %p126, %p127
      %p129 = scmp.ne.s32.totalorder %s118, %s121
      %p130 = scmp.eq.s32.totalorder %s23, 7
      %p131 = por %p129, %p130
      %p132 = scmp.ne.s32.totalorder %s121, %s122
      %p133 = scmp.eq.s32.totalorder %s23, 0
      %p134 = por %p132, %p133
      %p135 = scmp.ne.s32.totalorder %s121, %s122
      %p136 = scmp.eq.s32.totalorder %s24, 7
      %p137 = por %p135, %p136
      %p139 = scmp.ne.s32.totalorder %s122, %s138
      %p140 = scmp.eq.s32.totalorder %s24, 0
      %p141 = por %p139, %p140
      %s142 = ssub.s32 %s26, %s33
      %p143 = scmp.eq.s32.totalorder %s142, 0
      %s145 = sadd.s32 %s144, 1
      %s146 = scalar_select %p143, %s144, %s145
      %p149 = pneg %p143
      %p150 = scmp.eq.s32.totalorder %s18, 7
      %p151 = por %p149, %p150
      %p152 = scmp.ne.s32.totalorder %s144, %s147
      %p153 = scmp.eq.s32.totalorder %s18, 0
      %p154 = por %p152, %p153
      %p155 = scmp.ne.s32.totalorder %s144, %s147
      %p156 = scmp.eq.s32.totalorder %s23, 7
      %p157 = por %p155, %p156
      %p158 = scmp.ne.s32.totalorder %s147, %s148
      %p159 = scmp.eq.s32.totalorder %s23, 0
      %p160 = por %p158, %p159
      %p161 = scmp.ne.s32.totalorder %s147, %s148
      %p162 = scmp.eq.s32.totalorder %s24, 7
      %p163 = por %p161, %p162
      %p165 = scmp.ne.s32.totalorder %s148, %s164
      %p166 = scmp.eq.s32.totalorder %s24, 0
      %p167 = por %p165, %p166
      %s168 = ssub.s32 %s26, %s33
      %p169 = scmp.eq.s32.totalorder %s168, 0
      %s171 = sadd.s32 %s170, 1
      %s172 = scalar_select %p169, %s170, %s171
      %p175 = pneg %p169
      %p176 = scmp.eq.s32.totalorder %s18, 7
      %p177 = por %p175, %p176
      %p178 = scmp.ne.s32.totalorder %s170, %s173
      %p179 = scmp.eq.s32.totalorder %s18, 0
      %p180 = por %p178, %p179
      %p181 = scmp.ne.s32.totalorder %s170, %s173
      %p182 = scmp.eq.s32.totalorder %s23, 7
      %p183 = por %p181, %p182
      %p184 = scmp.ne.s32.totalorder %s173, %s174
      %p185 = scmp.eq.s32.totalorder %s23, 0
      %p186 = por %p184, %p185
      %p187 = scmp.ne.s32.totalorder %s173, %s174
      %p188 = scmp.eq.s32.totalorder %s24, 7
      %p189 = por %p187, %p188
      %p191 = scmp.ne.s32.totalorder %s174, %s190
      %p192 = scmp.eq.s32.totalorder %s24, 0
      %p193 = por %p191, %p192
      %s194 = ssub.s32 %s26, %s33
      %p195 = scmp.eq.s32.totalorder %s194, 0
      %s197 = sadd.s32 %s196, 1
      %s198 = scalar_select %p195, %s196, %s197
      %p201 = pneg %p195
      %p202 = scmp.eq.s32.totalorder %s18, 7
      %p203 = por %p201, %p202
      %p204 = scmp.ne.s32.totalorder %s196, %s199
      %p205 = scmp.eq.s32.totalorder %s18, 0
      %p206 = por %p204, %p205
      %p207 = scmp.ne.s32.totalorder %s196, %s199
      %p208 = scmp.eq.s32.totalorder %s23, 7
      %p209 = por %p207, %p208
      %p210 = scmp.ne.s32.totalorder %s199, %s200
      %p211 = scmp.eq.s32.totalorder %s23, 0
      %p212 = por %p210, %p211
      %p213 = scmp.ne.s32.totalorder %s199, %s200
      %p214 = scmp.eq.s32.totalorder %s24, 7
      %p215 = por %p213, %p214
      %p217 = scmp.ne.s32.totalorder %s200, %s216
      %p218 = scmp.eq.s32.totalorder %s24, 0
      %p219 = por %p217, %p218
      %s220 = ssub.s32 %s26, %s33
      %p221 = scmp.eq.s32.totalorder %s220, 0
      %s223 = sadd.s32 %s222, 1
      %s224 = scalar_select %p221, %s222, %s223
      %p227 = pneg %p221
      %p228 = scmp.eq.s32.totalorder %s18, 7
      %p229 = por %p227, %p228
      %p230 = scmp.ne.s32.totalorder %s222, %s225
      %p231 = scmp.eq.s32.totalorder %s18, 0
      %p232 = por %p230, %p231
      %p233 = scmp.ne.s32.totalorder %s222, %s225
      %p234 = scmp.eq.s32.totalorder %s23, 7
      %p235 = por %p233, %p234
      %p236 = scmp.ne.s32.totalorder %s225, %s226
      %p237 = scmp.eq.s32.totalorder %s23, 0
      %p238 = por %p236, %p237
      %p239 = scmp.ne.s32.totalorder %s225, %s226
      %p240 = scmp.eq.s32.totalorder %s24, 7
      %p241 = por %p239, %p240
      %p243 = scmp.ne.s32.totalorder %s226, %s242
      %p244 = scmp.eq.s32.totalorder %s24, 0
      %p245 = por %p243, %p244
      %s247 = sadd.s32 %s246, 1
      %p250 = scmp.eq.s32.totalorder %s18, 7
      %p251 = scmp.ne.s32.totalorder %s246, %s248
      %p252 = scmp.eq.s32.totalorder %s18, 0
      %p253 = por %p251, %p252
      %p254 = scmp.ne.s32.totalorder %s246, %s248
      %p255 = scmp.eq.s32.totalorder %s23, 7
      %p256 = por %p254, %p255
      %p257 = scmp.ne.s32.totalorder %s248, %s249
      %p258 = scmp.eq.s32.totalorder %s23, 0
      %p259 = por %p257, %p258
      %p260 = scmp.ne.s32.totalorder %s248, %s249
      %p261 = scmp.eq.s32.totalorder %s24, 7
      %p262 = por %p260, %p261
      %p264 = scmp.ne.s32.totalorder %s249, %s263
      %p265 = scmp.eq.s32.totalorder %s24, 0
      %p266 = por %p264, %p265
      %s267 = ssub.s32 %s25, %s37
      %p268 = scmp.eq.s32.totalorder %s267, 0
      %s270 = sadd.s32 %s269, 1
      %s271 = scalar_select %p268, %s269, %s270
      %p274 = pneg %p268
      %p275 = scmp.eq.s32.totalorder %s18, 7
      %p276 = por %p274, %p275
      %p277 = scmp.ne.s32.totalorder %s269, %s272
      %p278 = scmp.eq.s32.totalorder %s18, 0
      %p279 = por %p277, %p278
      %p280 = scmp.ne.s32.totalorder %s269, %s272
      %p281 = scmp.eq.s32.totalorder %s23, 7
      %p282 = por %p280, %p281
      %p283 = scmp.ne.s32.totalorder %s272, %s273
      %p284 = scmp.eq.s32.totalorder %s23, 0
      %p285 = por %p283, %p284
      %p286 = scmp.ne.s32.totalorder %s272, %s273
      %p287 = scmp.eq.s32.totalorder %s24, 7
      %p288 = por %p286, %p287
      %p290 = scmp.ne.s32.totalorder %s273, %s289
      %p291 = scmp.eq.s32.totalorder %s24, 0
      %p292 = por %p290, %p291
      %p293 = scmp.le.s32.totalorder 1, %s18
      %p294 = scmp.lt.s32.totalorder %s18, 9
      %p295 = pnand %p293, %p294
      %p296 = pneg %p295
      // Predicated region
      $region9: #{tpu_custom_call.1} parent=5 // pred_check
        _
      $region10: #{tpu_custom_call.1} parent=5 // pred_check_branch
        %298 = sbr.rel (%p295) target = $region12
      $region11: #{tpu_custom_call.1} parent=5 // pred_region
        %s299 = ssub.s32 %s18, 1
        // Predicated region
        $region13: #{tpu_custom_call.1} parent=11 // pred_check
          %p300 = pneg %p259
        $region14: #{tpu_custom_call.1} parent=11 // pred_check_branch
          %302 = sbr.rel (%p300) target = $region16
        $region15: #{tpu_custom_call.1} parent=11 // pred_region
          _
        $region16: #{tpu_custom_call.1} parent=11 // pred_fallthru
          _
      $region12: #{tpu_custom_call.1} parent=5 // pred_fallthru
        _
      %p303 = scmp.lt.s32.totalorder %s18, 8
      // Predicated region
      $region17: #{tpu_custom_call.1} parent=5 // pred_check
        %p304 = pneg %p303
      $region18: #{tpu_custom_call.1} parent=5 // pred_check_branch
        %306 = sbr.rel (%p304) target = $region20
      $region19: #{tpu_custom_call.1} parent=5 // pred_region
        // Predicated region
        $region21: #{tpu_custom_call.1} parent=19 // pred_check
          %p307 = pneg %p50
        $region22: #{tpu_custom_call.1} parent=19 // pred_check_branch
          %309 = sbr.rel (%p307) target = $region24
        $region23: #{tpu_custom_call.1} parent=19 // pred_region
          %p310 = scmp.lt.s32.totalorder %s25, 1
          %s311 = scalar_select %p310, %s25, 1
          %s312 = smul.addr %s311, 8
          %s313 = scalar_lea.vmem %s0, %s312
        $region24: #{tpu_custom_call.1} parent=19 // pred_fallthru
          _
        // Predicated region
        $region25: #{tpu_custom_call.1} parent=19 // pred_check
          %p314 = pneg %p76
        $region26: #{tpu_custom_call.1} parent=19 // pred_check_branch
          %316 = sbr.rel (%p314) target = $region28
        $region27: #{tpu_custom_call.1} parent=19 // pred_region
          %p317 = scmp.lt.s32.totalorder %s26, 3
          %s318 = scalar_select %p317, %s26, 3
          %s319 = smul.addr %s318, 4
          %s320 = smul.addr %s319, 8
          %s321 = scalar_lea.vmem %s1, %s320
        $region28: #{tpu_custom_call.1} parent=19 // pred_fallthru
          _
        // Predicated region
        $region29: #{tpu_custom_call.1} parent=19 // pred_check
          %p322 = pneg %p102
        $region30: #{tpu_custom_call.1} parent=19 // pred_check_branch
          %324 = sbr.rel (%p322) target = $region32
        $region31: #{tpu_custom_call.1} parent=19 // pred_region
          %p325 = scmp.lt.s32.totalorder %s26, 3
          %s326 = scalar_select %p325, %s26, 3
          %s327 = scalar_lea.vmem %s2, %s326
        $region32: #{tpu_custom_call.1} parent=19 // pred_fallthru
          _
        // Predicated region
        $region33: #{tpu_custom_call.1} parent=19 // pred_check
          %p328 = pneg %p128
        $region34: #{tpu_custom_call.1} parent=19 // pred_check_branch
          %330 = sbr.rel (%p328) target = $region36
        $region35: #{tpu_custom_call.1} parent=19 // pred_region
          %p331 = scmp.lt.s32.totalorder %s26, 3
          %s332 = scalar_select %p331, %s26, 3
          %s333 = smul.addr %s332, 4
          %s334 = smul.addr %s333, 8
          %s335 = scalar_lea.vmem %s3, %s334
        $region36: #{tpu_custom_call.1} parent=19 // pred_fallthru
          _
        // Predicated region
        $region37: #{tpu_custom_call.1} parent=19 // pred_check
          %p336 = pneg %p154
        $region38: #{tpu_custom_call.1} parent=19 // pred_check_branch
          %338 = sbr.rel (%p336) target = $region40
        $region39: #{tpu_custom_call.1} parent=19 // pred_region
          %p339 = scmp.lt.s32.totalorder %s26, 3
          %s340 = scalar_select %p339, %s26, 3
          %s341 = scalar_lea.vmem %s4, %s340
        $region40: #{tpu_custom_call.1} parent=19 // pred_fallthru
          _
        // Predicated region
        $region41: #{tpu_custom_call.1} parent=19 // pred_check
          %p342 = pneg %p180
        $region42: #{tpu_custom_call.1} parent=19 // pred_check_branch
          %344 = sbr.rel (%p342) target = $region44
        $region43: #{tpu_custom_call.1} parent=19 // pred_region
          %p345 = scmp.lt.s32.totalorder %s26, 3
          %s346 = scalar_select %p345, %s26, 3
          %s347 = smul.addr %s346, 4
          %s348 = smul.addr %s347, 8
          %s349 = scalar_lea.vmem %s5, %s348
        $region44: #{tpu_custom_call.1} parent=19 // pred_fallthru
          _
        // Predicated region
        $region45: #{tpu_custom_call.1} parent=19 // pred_check
          %p350 = pneg %p206
        $region46: #{tpu_custom_call.1} parent=19 // pred_check_branch
          %352 = sbr.rel (%p350) target = $region48
        $region47: #{tpu_custom_call.1} parent=19 // pred_region
          %p353 = scmp.lt.s32.totalorder %s26, 3
          %s354 = scalar_select %p353, %s26, 3
          %s355 = scalar_lea.vmem %s6, %s354
        $region48: #{tpu_custom_call.1} parent=19 // pred_fallthru
          _
        // Predicated region
        $region49: #{tpu_custom_call.1} parent=19 // pred_check
          %p356 = pneg %p232
        $region50: #{tpu_custom_call.1} parent=19 // pred_check_branch
          %358 = sbr.rel (%p356) target = $region52
        $region51: #{tpu_custom_call.1} parent=19 // pred_region
          %p359 = scmp.lt.s32.totalorder %s26, 3
          %s360 = scalar_select %p359, %s26, 3
          %s361 = smul.addr %s360, 8
          %s362 = scalar_lea.vmem %s7, %s361
        $region52: #{tpu_custom_call.1} parent=19 // pred_fallthru
          _
      $region20: #{tpu_custom_call.1} parent=5 // pred_fallthru
        _
      %p363 = scmp.le.s32.totalorder 1, %s18
      %p364 = scmp.lt.s32.totalorder %s18, 9
      %p365 = pnand %p363, %p364
      %p366 = pneg %p365
      // Predicated region
      $region53: #{tpu_custom_call.1} parent=5 // pred_check
        _
      $region54: #{tpu_custom_call.1} parent=5 // pred_check_branch
        %368 = sbr.rel (%p365) target = $region56
      $region55: #{tpu_custom_call.1} parent=5 // pred_region
        %s369 = ssub.s32 %s18, 1
        %p370 = scmp.lt.s32.totalorder %s27, 1
        %s371 = scalar_select %p370, %s27, 1
        %s372 = smul.addr %s371, 8
        %s373 = scalar_lea.vmem %s0, %s372
        %p374 = pneg %p56
        %p375 = pneg %p53
        %p376 = scmp.lt.s32.totalorder %s28, 3
        %s377 = scalar_select %p376, %s28, 3
        %s378 = smul.addr %s377, 4
        %s379 = smul.addr %s378, 8
        %s380 = scalar_lea.vmem %s1, %s379
        %p381 = pneg %p82
        %p382 = pneg %p79
        %p383 = scmp.lt.s32.totalorder %s28, 3
        %s384 = scalar_select %p383, %s28, 3
        %s385 = scalar_lea.vmem %s2, %s384
        %p386 = pneg %p108
        %p387 = pneg %p105
        %p388 = scmp.lt.s32.totalorder %s28, 3
        %s389 = scalar_select %p388, %s28, 3
        %s390 = smul.addr %s389, 4
        %s391 = smul.addr %s390, 8
        %s392 = scalar_lea.vmem %s3, %s391
        %p393 = pneg %p134
        %p394 = pneg %p131
        %p395 = scmp.lt.s32.totalorder %s28, 3
        %s396 = scalar_select %p395, %s28, 3
        %s397 = scalar_lea.vmem %s4, %s396
        %p398 = pneg %p160
        %p399 = pneg %p157
        %p400 = scmp.lt.s32.totalorder %s28, 3
        %s401 = scalar_select %p400, %s28, 3
        %s402 = smul.addr %s401, 4
        %s403 = smul.addr %s402, 8
        %s404 = scalar_lea.vmem %s5, %s403
        %p405 = pneg %p186
        %p406 = pneg %p183
        %p407 = scmp.lt.s32.totalorder %s28, 3
        %s408 = scalar_select %p407, %s28, 3
        %s409 = scalar_lea.vmem %s6, %s408
        %p410 = pneg %p212
        %p411 = pneg %p209
        %p412 = scmp.lt.s32.totalorder %s28, 3
        %s413 = scalar_select %p412, %s28, 3
        %s414 = smul.addr %s413, 8
        %s415 = scalar_lea.vmem %s7, %s414
        %p416 = pneg %p238
        %p417 = pneg %p235
        %p418 = pneg %p259
        %p419 = pneg %p256
        %p420 = pneg %p285
        %p421 = pneg %p282
        %s422 = sand.u32 %s272, 1
        %s423 = scalar_lea.sflag [#allocation4], %s422
        %s424 = sand.u32 %s272, 1
        %s425 = smul.addr %s424, 8
        %s426 = scalar_lea.vmem [#allocation3], %s425
        %p427 = scmp.lt.s32.totalorder %s27, 1
        %s428 = scalar_select %p427, %s27, 1
        %s429 = smul.addr %s428, 8
        %s430 = scalar_lea.vmem %s0, %s429
        %p431 = scmp.lt.s32.totalorder %s28, 3
        %s432 = scalar_select %p431, %s28, 3
        %s433 = smul.addr %s432, 4
        %s434 = smul.addr %s433, 8
        %s435 = scalar_lea.vmem %s1, %s434
        %p436 = scmp.lt.s32.totalorder %s28, 3
        %s437 = scalar_select %p436, %s28, 3
        %s438 = scalar_lea.vmem %s2, %s437
        %p439 = scmp.lt.s32.totalorder %s28, 3
        %s440 = scalar_select %p439, %s28, 3
        %s441 = smul.addr %s440, 4
        %s442 = smul.addr %s441, 8
        %s443 = scalar_lea.vmem %s3, %s442
        %p444 = scmp.lt.s32.totalorder %s28, 3
        %s445 = scalar_select %p444, %s28, 3
        %s446 = scalar_lea.vmem %s4, %s445
        %p447 = scmp.lt.s32.totalorder %s28, 3
        %s448 = scalar_select %p447, %s28, 3
        %s449 = smul.addr %s448, 4
        %s450 = smul.addr %s449, 8
        %s451 = scalar_lea.vmem %s5, %s450
        %p452 = scmp.lt.s32.totalorder %s28, 3
        %s453 = scalar_select %p452, %s28, 3
        %s454 = scalar_lea.vmem %s6, %s453
        %p455 = scmp.lt.s32.totalorder %s28, 3
        %s456 = scalar_select %p455, %s28, 3
        %s457 = smul.addr %s456, 8
        %s458 = scalar_lea.vmem %s7, %s457
        %p460 = scmp.eq.s32.totalorder %s28, 0
        // Predicated region
        $region57: #{tpu_custom_call.1} parent=55 // pred_check
          %p461 = pneg %p460
        $region58: #{tpu_custom_call.1} parent=55 // pred_check_branch
          %463 = sbr.rel (%p461) target = $region60
        $region59: #{tpu_custom_call.1} parent=55 // pred_region
          %vm464 = vcmask 261120
          %465 = vst.msk [vmem:[#allocation2] sm:$0xff] %vm464, 0.0
        $region60: #{tpu_custom_call.1} parent=55 // pred_fallthru
          _
        %v466 = vld [vmem:[%s430] sm:$0xff]
        %v467 = vpack.c.bf16 %v466, %v466
        %v468 = vld [vmem:[%s435] sm:$0xff]
        %v469 = vld [vmem:[%s435 + $0x8] sm:$0xff]
        %v470 = vld [vmem:[%s435 + $0x10] sm:$0xff]
        %v471 = vld [vmem:[%s435 + $0x18] sm:$0xff]
        %v472 = vpack.c.bf16 %v469, %v468
        %v473 = vpack.c.bf16 %v471, %v470
        %v474 = vld [vmem:[%s443] sm:$0xff]
        %v475 = vld [vmem:[%s443 + $0x8] sm:$0xff]
        %v476 = vld [vmem:[%s443 + $0x10] sm:$0xff]
        %v477 = vld [vmem:[%s443 + $0x18] sm:$0xff]
        %v478 = vpack.c.bf16 %v475, %v474
        %v479 = vpack.c.bf16 %v477, %v476
        %v480 = vld [vmem:[%s451] sm:$0xff]
        %v481 = vld [vmem:[%s451 + $0x8] sm:$0xff]
        %v482 = vld [vmem:[%s451 + $0x10] sm:$0xff]
        %v483 = vld [vmem:[%s451 + $0x18] sm:$0xff]
        %v484 = vpack.c.bf16 %v481, %v480
        %v485 = vpack.c.bf16 %v483, %v482
        %v486 = vld [vmem:[%s458] sm:$0xff]
        %v487 = vpack.c.bf16 %v486, %v486
        %v488 = vld [vmem:[%s438] sm:$0x1]
        %v490 = vlaneseq
        %v491 = vshrl.u32 %v490, 7
        %v492 = vsub.s32 0, %v491
        %v493 = vrot.slane %v488, %v492
        %vm495 = vcmask 261120
        %v497 = vsel %vm495, %v467, 0
        %499 = vmatprep.subr.bf16.mxu0 0
        %500 = vmatpush1.bf16.msra.mxu0 %v472
        %501 = vmatprep.subr.bf16.mxu0 0
        %502 = vmatpush1.bf16.msra.mxu0 %v473
        %503 = vmatprep.subr.bf16.mxu0 0
        %504 = vmatpush1.bf16.msra.mxu0 0
        %505 = vmatprep.subr.bf16.mxu0 0
        %506 = vmatpush1.bf16.msra.mxu0 0
        %507 = vmatprep.subr.bf16.mxu0 0
        %508 = vmatpush1.bf16.msra.mxu0 0
        %509 = vmatprep.subr.bf16.mxu0 0
        %510 = vmatpush1.bf16.msra.mxu0 0
        %511 = vmatprep.subr.bf16.mxu0 0
        %512 = vmatpush1.bf16.msra.mxu0 0
        %513 = vmatprep.subr.bf16.mxu0 0
        %514 = vmatpush1.bf16.msra.mxu0 0
        %515 = vmatprep.subr.bf16.mxu0 0
        %516 = vmatpush1.bf16.msra.mxu0 0
        %517 = vmatprep.subr.bf16.mxu0 0
        %518 = vmatpush1.bf16.msra.mxu0 0
        %519 = vmatprep.subr.bf16.mxu0 0
        %520 = vmatpush1.bf16.msra.mxu0 0
        %521 = vmatprep.subr.bf16.mxu0 0
        %522 = vmatpush1.bf16.msra.mxu0 0
        %523 = vmatprep.subr.bf16.mxu0 0
        %524 = vmatpush1.bf16.msra.mxu0 0
        %525 = vmatprep.subr.bf16.mxu0 0
        %526 = vmatpush1.bf16.msra.mxu0 0
        %527 = vmatprep.subr.bf16.mxu0 0
        %528 = vmatpush1.bf16.msra.mxu0 0
        %529 = vmatprep.subr.bf16.mxu0 0
        %530 = vmatpush1.bf16.msra.mxu0 0
        %531 = vmatprep.mubr.bf16.mxu0 0
        %532 = vmatmul.mubr.bf16.gmra.mrb[0].mxu0 %v497
        %v533 = vpop.f32.mrb[0].mxu0
        %v534 = vadd.f32 %v493, %v533
        %v535 = vpop.f32.mrb[0].mxu0
        %v536 = vpop.f32.mrb[0].mxu0
        %v537 = vpop.f32.mrb[0].mxu0
        %538 = vdwg.mxu0
        %v539 = vld [vmem:[%s446] sm:$0x1]
        %v541 = vlaneseq
        %v542 = vshrl.u32 %v541, 7
        %v543 = vsub.s32 0, %v542
        %v544 = vrot.slane %v539, %v543
        %546 = vmatprep.subr.bf16.mxu0 0
        %547 = vmatpush1.bf16.msra.mxu0 %v478
        %548 = vmatprep.subr.bf16.mxu0 0
        %549 = vmatpush1.bf16.msra.mxu0 %v479
        %550 = vmatprep.subr.bf16.mxu0 0
        %551 = vmatpush1.bf16.msra.mxu0 0
        %552 = vmatprep.subr.bf16.mxu0 0
        %553 = vmatpush1.bf16.msra.mxu0 0
        %554 = vmatprep.subr.bf16.mxu0 0
        %555 = vmatpush1.bf16.msra.mxu0 0
        %556 = vmatprep.subr.bf16.mxu0 0
        %557 = vmatpush1.bf16.msra.mxu0 0
        %558 = vmatprep.subr.bf16.mxu0 0
        %559 = vmatpush1.bf16.msra.mxu0 0
        %560 = vmatprep.subr.bf16.mxu0 0
        %561 = vmatpush1.bf16.msra.mxu0 0
        %562 = vmatprep.subr.bf16.mxu0 0
        %563 = vmatpush1.bf16.msra.mxu0 0
        %564 = vmatprep.subr.bf16.mxu0 0
        %565 = vmatpush1.bf16.msra.mxu0 0
        %566 = vmatprep.subr.bf16.mxu0 0
        %567 = vmatpush1.bf16.msra.mxu0 0
        %568 = vmatprep.subr.bf16.mxu0 0
        %569 = vmatpush1.bf16.msra.mxu0 0
        %570 = vmatprep.subr.bf16.mxu0 0
        %571 = vmatpush1.bf16.msra.mxu0 0
        %572 = vmatprep.subr.bf16.mxu0 0
        %573 = vmatpush1.bf16.msra.mxu0 0
        %574 = vmatprep.subr.bf16.mxu0 0
        %575 = vmatpush1.bf16.msra.mxu0 0
        %576 = vmatprep.subr.bf16.mxu0 0
        %577 = vmatpush1.bf16.msra.mxu0 0
        %578 = vmatprep.mubr.bf16.mxu0 0
        %579 = vmatmul.mubr.bf16.gmra.mrb[0].mxu0 %v497
        %v580 = vpop.f32.mrb[0].mxu0
        %v581 = vadd.f32 %v544, %v580
        %v582 = vpop.f32.mrb[0].mxu0
        %v583 = vpop.f32.mrb[0].mxu0
        %v584 = vpop.f32.mrb[0].mxu0
        %585 = vdwg.mxu0
        %v586 = vld [vmem:[%s454] sm:$0x1]
        %v588 = vlaneseq
        %v589 = vshrl.u32 %v588, 7
        %v590 = vsub.s32 0, %v589
        %v591 = vrot.slane %v586, %v590
        %593 = vmatprep.subr.bf16.mxu0 0
        %594 = vmatpush1.bf16.msra.mxu0 %v484
        %595 = vmatprep.subr.bf16.mxu0 0
        %596 = vmatpush1.bf16.msra.mxu0 %v485
        %597 = vmatprep.subr.bf16.mxu0 0
        %598 = vmatpush1.bf16.msra.mxu0 0
        %599 = vmatprep.subr.bf16.mxu0 0
        %600 = vmatpush1.bf16.msra.mxu0 0
        %601 = vmatprep.subr.bf16.mxu0 0
        %602 = vmatpush1.bf16.msra.mxu0 0
        %603 = vmatprep.subr.bf16.mxu0 0
        %604 = vmatpush1.bf16.msra.mxu0 0
        %605 = vmatprep.subr.bf16.mxu0 0
        %606 = vmatpush1.bf16.msra.mxu0 0
        %607 = vmatprep.subr.bf16.mxu0 0
        %608 = vmatpush1.bf16.msra.mxu0 0
        %609 = vmatprep.subr.bf16.mxu0 0
        %610 = vmatpush1.bf16.msra.mxu0 0
        %611 = vmatprep.subr.bf16.mxu0 0
        %612 = vmatpush1.bf16.msra.mxu0 0
        %613 = vmatprep.subr.bf16.mxu0 0
        %614 = vmatpush1.bf16.msra.mxu0 0
        %615 = vmatprep.subr.bf16.mxu0 0
        %616 = vmatpush1.bf16.msra.mxu0 0
        %617 = vmatprep.subr.bf16.mxu0 0
        %618 = vmatpush1.bf16.msra.mxu0 0
        %619 = vmatprep.subr.bf16.mxu0 0
        %620 = vmatpush1.bf16.msra.mxu0 0
        %621 = vmatprep.subr.bf16.mxu0 0
        %622 = vmatpush1.bf16.msra.mxu0 0
        %623 = vmatprep.subr.bf16.mxu0 0
        %624 = vmatpush1.bf16.msra.mxu0 0
        %625 = vmatprep.mubr.bf16.mxu0 0
        %626 = vmatmul.mubr.bf16.gmra.mrb[0].mxu0 %v497
        %v627 = vpop.f32.mrb[0].mxu0
        %v628 = vadd.f32 %v591, %v627
        %v629 = vpop.f32.mrb[0].mxu0
        %v630 = vpop.f32.mrb[0].mxu0
        %v631 = vpop.f32.mrb[0].mxu0
        %632 = vdwg.mxu0
        %v633 = vmul.f32 %v534, 0.35355338
        %v634 = vpack.c.bf16 %v633, %v633
        %v635 = vpack.c.bf16 %v581, %v581
        %v636 = vpack.c.bf16 %v628, %v628
        %v637 = vlaneseq
        %v638 = vshrl.u32 %v637, 7
        %v639 = vlaneseq
        %v640 = vand.u32 %v639, 127
        %vm641 = vcmp.le.s32.totalorder %v640, %v638
        %v642 = vsel %vm641, 0.0, -1e+30
        %vm643 = vcmask 64512
        %v645 = vsel %vm643, %v634, 0
        %v648 = vsel %vm643, %v635, 0
        %650 = vmatprep.subr.bf16.mxu0 0
        %651 = vmatpush1.bf16.xpose.msra.mxu0 %v648
        %652 = vmatprep.subr.bf16.mxu0 0
        %653 = vmatpush1.bf16.xpose.msra.mxu0 0
        %654 = vmatprep.subr.bf16.mxu0 0
        %655 = vmatpush1.bf16.xpose.msra.mxu0 0
        %656 = vmatprep.subr.bf16.mxu0 0
        %657 = vmatpush1.bf16.xpose.msra.mxu0 0
        %658 = vmatprep.subr.bf16.mxu0 0
        %659 = vmatpush1.bf16.xpose.msra.mxu0 0
        %660 = vmatprep.subr.bf16.mxu0 0
        %661 = vmatpush1.bf16.xpose.msra.mxu0 0
        %662 = vmatprep.subr.bf16.mxu0 0
        %663 = vmatpush1.bf16.xpose.msra.mxu0 0
        %664 = vmatprep.subr.bf16.mxu0 0
        %665 = vmatpush1.bf16.xpose.msra.mxu0 0
        %666 = vmatprep.subr.bf16.mxu0 0
        %667 = vmatpush1.bf16.xpose.msra.mxu0 0
        %668 = vmatprep.subr.bf16.mxu0 0
        %669 = vmatpush1.bf16.xpose.msra.mxu0 0
        %670 = vmatprep.subr.bf16.mxu0 0
        %671 = vmatpush1.bf16.xpose.msra.mxu0 0
        %672 = vmatprep.subr.bf16.mxu0 0
        %673 = vmatpush1.bf16.xpose.msra.mxu0 0
        %674 = vmatprep.subr.bf16.mxu0 0
        %675 = vmatpush1.bf16.xpose.msra.mxu0 0
        %676 = vmatprep.subr.bf16.mxu0 0
        %677 = vmatpush1.bf16.xpose.msra.mxu0 0
        %678 = vmatprep.subr.bf16.mxu0 0
        %679 = vmatpush1.bf16.xpose.msra.mxu0 0
        %680 = vmatprep.subr.bf16.mxu0 0
        %681 = vmatpush1.bf16.xpose.msra.mxu0 0
        %682 = vmatprep.mubr.bf16.mxu0 0
        %683 = vmatmul.mubr.bf16.gmra.mrb[0].mxu0 %v645
        %v684 = vpop.f32.mrb[0].mxu0
        %v685 = vadd.f32 %v642, %v684
        %v686 = vpop.f32.mrb[0].mxu0
        %v687 = vpop.f32.mrb[0].mxu0
        %v688 = vpop.f32.mrb[0].mxu0
        %689 = vdwg.mxu0
        %v690 = vsel %vm643, %v685, -inf
        %691 = vmax.xlane.f32.xlu0 %v690
        %v692 = vpop.xlane.xlu0 %691
        %v693 = vsub.f32 %v685, %v692
        %v694 = vmul.f32 %v693, 1.442695
        %v695 = vpow.pop %v694
        %v696 = vsel %vm643, %v695, 0.0
        %697 = vadd.xlane.f32.xlu0 %v696
        %v698 = vpop.xlane.xlu0 %697
        %v699 = vrcp.pop %v698
        %v700 = vmul.f32 %v695, %v699
        %v701 = vpack.c.bf16 %v700, %v700
        %v703 = vsel %vm643, %v701, 0
        %vm705 = vcmask 1043456
        %v707 = vsel %vm705, %v636, 0
        %709 = vmatprep.subr.bf16.mxu0 0
        %710 = vmatpush1.bf16.msra.mxu0 %v707
        %711 = vmatprep.subr.bf16.mxu0 0
        %712 = vmatpush1.bf16.msra.mxu0 0
        %713 = vmatprep.subr.bf16.mxu0 0
        %714 = vmatpush1.bf16.msra.mxu0 0
        %715 = vmatprep.subr.bf16.mxu0 0
        %716 = vmatpush1.bf16.msra.mxu0 0
        %717 = vmatprep.subr.bf16.mxu0 0
        %718 = vmatpush1.bf16.msra.mxu0 0
        %719 = vmatprep.subr.bf16.mxu0 0
        %720 = vmatpush1.bf16.msra.mxu0 0
        %721 = vmatprep.subr.bf16.mxu0 0
        %722 = vmatpush1.bf16.msra.mxu0 0
        %723 = vmatprep.subr.bf16.mxu0 0
        %724 = vmatpush1.bf16.msra.mxu0 0
        %725 = vmatprep.subr.bf16.mxu0 0
        %726 = vmatpush1.bf16.msra.mxu0 0
        %727 = vmatprep.subr.bf16.mxu0 0
        %728 = vmatpush1.bf16.msra.mxu0 0
        %729 = vmatprep.subr.bf16.mxu0 0
        %730 = vmatpush1.bf16.msra.mxu0 0
        %731 = vmatprep.subr.bf16.mxu0 0
        %732 = vmatpush1.bf16.msra.mxu0 0
        %733 = vmatprep.subr.bf16.mxu0 0
        %734 = vmatpush1.bf16.msra.mxu0 0
        %735 = vmatprep.subr.bf16.mxu0 0
        %736 = vmatpush1.bf16.msra.mxu0 0
        %737 = vmatprep.subr.bf16.mxu0 0
        %738 = vmatpush1.bf16.msra.mxu0 0
        %739 = vmatprep.subr.bf16.mxu0 0
        %740 = vmatpush1.bf16.msra.mxu0 0
        %741 = vmatprep.mubr.bf16.mxu0 0
        %742 = vmatmul.mubr.bf16.gmra.mrb[0].mxu0 %v703
        %v743 = vpop.f32.mrb[0].mxu0
        %v744 = vadd.f32 0.0, %v743
        %v745 = vpop.f32.mrb[0].mxu0
        %v746 = vpop.f32.mrb[0].mxu0
        %v747 = vpop.f32.mrb[0].mxu0
        %748 = vdwg.mxu0
        %v749 = vld [vmem:[#allocation2] sm:$0xff]
        %v750 = vpack.c.bf16 %v744, %v744
        %v752 = vsel %vm643, %v750, 0
        %v755 = vsel %vm705, %v487, 0
        %757 = vmatprep.subr.bf16.mxu0 0
        %758 = vmatpush1.bf16.msra.mxu0 %v755
        %759 = vmatprep.subr.bf16.mxu0 0
        %760 = vmatpush1.bf16.msra.mxu0 0
        %761 = vmatprep.subr.bf16.mxu0 0
        %762 = vmatpush1.bf16.msra.mxu0 0
        %763 = vmatprep.subr.bf16.mxu0 0
        %764 = vmatpush1.bf16.msra.mxu0 0
        %765 = vmatprep.subr.bf16.mxu0 0
        %766 = vmatpush1.bf16.msra.mxu0 0
        %767 = vmatprep.subr.bf16.mxu0 0
        %768 = vmatpush1.bf16.msra.mxu0 0
        %769 = vmatprep.subr.bf16.mxu0 0
        %770 = vmatpush1.bf16.msra.mxu0 0
        %771 = vmatprep.subr.bf16.mxu0 0
        %772 = vmatpush1.bf16.msra.mxu0 0
        %773 = vmatprep.subr.bf16.mxu0 0
        %774 = vmatpush1.bf16.msra.mxu0 0
        %775 = vmatprep.subr.bf16.mxu0 0
        %776 = vmatpush1.bf16.msra.mxu0 0
        %777 = vmatprep.subr.bf16.mxu0 0
        %778 = vmatpush1.bf16.msra.mxu0 0
        %779 = vmatprep.subr.bf16.mxu0 0
        %780 = vmatpush1.bf16.msra.mxu0 0
        %781 = vmatprep.subr.bf16.mxu0 0
        %782 = vmatpush1.bf16.msra.mxu0 0
        %783 = vmatprep.subr.bf16.mxu0 0
        %784 = vmatpush1.bf16.msra.mxu0 0
        %785 = vmatprep.subr.bf16.mxu0 0
        %786 = vmatpush1.bf16.msra.mxu0 0
        %787 = vmatprep.subr.bf16.mxu0 0
        %788 = vmatpush1.bf16.msra.mxu0 0
        %789 = vmatprep.mubr.bf16.mxu0 0
        %790 = vmatmul.mubr.bf16.gmra.mrb[0].mxu0 %v752
        %v791 = vpop.f32.mrb[0].mxu0
        %v792 = vadd.f32 0.0, %v791
        %v793 = vpop.f32.mrb[0].mxu0
        %v794 = vpop.f32.mrb[0].mxu0
        %v795 = vpop.f32.mrb[0].mxu0
        %796 = vdwg.mxu0
        %v797 = vadd.f32 %v749, %v792
        %798 = vst.msk [vmem:[#allocation2] sm:$0xff] %vm495, %v797
        %p799 = scmp.eq.s32.totalorder %s28, 3
        // Predicated region
        $region61: #{tpu_custom_call.1} parent=55 // pred_check
          %p800 = pneg %p799
        $region62: #{tpu_custom_call.1} parent=55 // pred_check_branch
          %802 = sbr.rel (%p800) target = $region64
        $region63: #{tpu_custom_call.1} parent=55 // pred_region
          %v803 = vld [vmem:[#allocation2] sm:$0xff]
          %v804 = vld [vmem:[%s8] sm:$0x1]
          %v806 = vlaneseq
          %v807 = vshrl.u32 %v806, 7
          %v808 = vsub.s32 0, %v807
          %v809 = vrot.slane %v804, %v808
          %v811 = vadd.f32 %v803, %v809
          %812 = vst.msk [vmem:[%s426] sm:$0xff] %vm495, %v811
        $region64: #{tpu_custom_call.1} parent=55 // pred_fallthru
          _
        %s813 = sand.u32 %s272, 1
        %s814 = scalar_lea.sflag [#allocation4], %s813
        %s815 = sand.u32 %s272, 1
        %s816 = smul.addr %s815, 8
        %s817 = scalar_lea.vmem [#allocation3], %s816
        // Predicated region
        $region65: #{tpu_custom_call.1} parent=55 // pred_check
          %p818 = pneg %p282
        $region66: #{tpu_custom_call.1} parent=55 // pred_check_branch
          %820 = sbr.rel (%p818) target = $region68
        $region67: #{tpu_custom_call.1} parent=55 // pred_region
          %s822 = ssub.s32 128, 128
          %823 = vsyncadd %s814, %s822
          %s824 = smul.addr %s27, 128
          %s825 = scalar_lea.hbm %s9, %s824
          %s827 = sshll.u32 %s817, 4
          %s828 = int_to_ptr.vmem [resolvable:$true] %s827
          %830 = dma.vmem_to_hbm [thread:$0]  %s828, 128, %s825, %s814
        $region68: #{tpu_custom_call.1} parent=55 // pred_fallthru
          _
      $region56: #{tpu_custom_call.1} parent=5 // pred_fallthru
        _
      %p831 = scmp.le.s32.totalorder 2, %s18
      // Predicated region
      $region69: #{tpu_custom_call.1} parent=5 // pred_check
        %p832 = pneg %p831
      $region70: #{tpu_custom_call.1} parent=5 // pred_check_branch
        %834 = sbr.rel (%p832) target = $region72
      $region71: #{tpu_custom_call.1} parent=5 // pred_region
        %s835 = ssub.s32 %s18, 2
        // Predicated region
        $region73: #{tpu_custom_call.1} parent=71 // pred_check
          %p836 = pneg %p288
        $region74: #{tpu_custom_call.1} parent=71 // pred_check_branch
          %838 = sbr.rel (%p836) target = $region76
        $region75: #{tpu_custom_call.1} parent=71 // pred_region
          %s839 = sand.u32 %s273, 1
          %s840 = scalar_lea.sflag [#allocation4], %s839
          %s841 = sand.u32 %s273, 1
          %s842 = smul.addr %s841, 8
          %s843 = scalar_lea.vmem [#allocation3], %s842
          %844 = dma.done %s840, 128
        $region76: #{tpu_custom_call.1} parent=71 // pred_fallthru
          _
      $region72: #{tpu_custom_call.1} parent=5 // pred_fallthru
        _
    $region6: #{tpu_custom_call.1} parent=1 // loop_footer
      %s22 = sadd.s32 1, %s18
    $region7: #{tpu_custom_call.1} parent=1 // loop_footer_branch
      %17 = sbr.rel target = $region3
    $region8: #{tpu_custom_call.1} parent=1 // loop_exit
      _
    %845 = vsyncpa [#allocation4], 1
    %s846 = scalar_lea.sflag [#allocation4], 1
    %847 = vsyncpa %s846, 1

</llo_original>
